<compile_context>
chip_gen: v6e
topology: v6e:2x2x1
jax: 0.10.0
libtpu: 0.0.40
codegen_flags: <defaults>
</compile_context>

<pallas_src>
import math

import jax
import jax.numpy as jnp
from jax import lax
from jax.experimental import pallas as pl
from jax.experimental.pallas import tpu as pltpu


_SQRT_HALF = 0.7071067811865476


def _erf_approx(x):
    # Abramowitz & Stegun 7.1.26 rational approximation (max abs err ~1.5e-7).
    a1, a2, a3, a4, a5 = (0.254829592, -0.284496736, 1.421413741,
                          -1.453152027, 1.061405429)
    p = 0.3275911
    sgn = jnp.where(x >= 0.0, 1.0, -1.0)
    ax = jnp.abs(x)
    # pl.reciprocal instead of a full VALU divide over the (tm, Hc) activation.
    t = pl.reciprocal(1.0 + p * ax, approx=False)
    poly = ((((a5 * t + a4) * t + a3) * t + a2) * t + a1) * t
    return sgn * (1.0 - poly * jnp.exp(-(ax * ax)))


def _gelu_exact(x):
    # Exact (erf-based) GELU, matching PyTorch nn.GELU() default.
    return 0.5 * x * (1.0 + _erf_approx(x * _SQRT_HALF))


# ----------------------------- kernels ------------------------------------


def _make_simple_kernel():
    # Single hidden chunk: fc1 -> GELU -> fc2 with no scratch accumulator.
    def kernel(x_ref, w1_ref, b1_ref, w2_ref, b2_ref, o_ref):
        x = x_ref[...]                                            # (tm, C)
        h = jnp.dot(x, w1_ref[...], preferred_element_type=jnp.float32)
        h = _gelu_exact(h + b1_ref[...].astype(jnp.float32))
        h = h.astype(w2_ref.dtype)                                # single cast back
        y = jnp.dot(h, w2_ref[...], preferred_element_type=jnp.float32)
        o_ref[...] = (y + b2_ref[...].astype(jnp.float32)).astype(o_ref.dtype)
    return kernel


def _make_chunked_kernel(Hc, n_chunks):
    # Loop over Hc-wide hidden chunks; accumulate fc2 partials in (tm, C) f32
    # VMEM scratch so the live intermediate stays (tm, Hc).
    def kernel(x_ref, w1_ref, b1_ref, w2_ref, b2_ref, o_ref, acc_ref):
        x = x_ref[...]
        acc_ref[...] = jnp.zeros_like(acc_ref)

        def body(j, carry):
            h0 = pl.multiple_of(j * Hc, Hc)
            h = jnp.dot(x, w1_ref[:, pl.ds(h0, Hc)],
                        preferred_element_type=jnp.float32)
            h = _gelu_exact(h + b1_ref[:, pl.ds(h0, Hc)].astype(jnp.float32))
            h = h.astype(w2_ref.dtype)
            acc_ref[...] += jnp.dot(h, w2_ref[pl.ds(h0, Hc), :],
                                    preferred_element_type=jnp.float32)
            return carry

        lax.fori_loop(0, n_chunks, body, 0, unroll=(n_chunks <= 8))
        o_ref[...] = (acc_ref[...] + b2_ref[...].astype(jnp.float32)
                      ).astype(o_ref.dtype)
    return kernel


# --------------------------- tiling helpers --------------------------------


def _tpu_vmem_capacity():
    try:
        return int(pltpu.get_tpu_info().vmem_capacity_bytes)
    except Exception:
        return 64 * 1024 * 1024          # conservative (v7x-class) fallback


def _vmem_limit(vmem_capacity):
    if vmem_capacity >= 96 * 1024 * 1024:
        return int(vmem_capacity * 0.75)  # v5e/v6e (128 MiB) -> ~96 MiB
    return int(vmem_capacity * 0.70)      # v7x (64 MiB/TC)   -> ~45 MiB


def _tile_candidates(vmem_capacity):
    if vmem_capacity <= 80 * 1024 * 1024:
        return (256, 128, 64, 32, 16, 8)          # v7x-class budget
    return (512, 256, 128, 64, 32, 16, 8)          # v5e / v6e


def _pick_row_tile(M, candidates):
    """Largest row tile whose padding overhead is <= ~12.5% of M."""
    m8 = ((M + 7) // 8) * 8
    tm = 8
    for t in candidates:
        if t > m8:
            continue
        padded = ((m8 + t - 1) // t) * t
        if (padded - M) <= max(M // 8, 7):
            tm = t
            break
    m_pad = ((m8 + tm - 1) // tm) * tm
    return tm, m_pad


def _pick_hidden_chunk(H, override=None):
    if override is not None:
        assert H % override == 0, "hidden_chunk must divide hidden_features"
        return override
    if H <= 512:
        return H
    for hc in (512, 384, 256, 128):
        if H % hc == 0:
            return hc
    return H


# ------------------------------ wrapper -------------------------------------


def mlp_forward(x, w1, b1, w2, b2, *, compute_dtype=None, hidden_chunk=None):
    orig_shape = x.shape
    C = orig_shape[-1]
    H = w1.shape[1]
    assert w1.shape == (C, H) and w2.shape == (H, C)
    out_dtype = x.dtype

    M = math.prod(orig_shape[:-1])
    x2 = x.reshape(M, C)                 # lane-dense token slab
    b1 = b1.reshape(1, H)
    b2 = b2.reshape(1, C)

    # Optional bf16 storage path: bf16 MXU inputs, f32 accumulation, f32 GELU.
    if compute_dtype is not None:
        x2 = x2.astype(compute_dtype)
        w1 = w1.astype(compute_dtype)
        w2 = w2.astype(compute_dtype)

    vmem_capacity = _tpu_vmem_capacity()
    vmem_limit = _vmem_limit(vmem_capacity)
    tm, M_pad = _pick_row_tile(M, _tile_candidates(vmem_capacity))
    if M_pad != M:
        x2 = jnp.pad(x2, ((0, M_pad - M), (0, 0)))

    Hc = _pick_hidden_chunk(H, hidden_chunk)
    n_chunks = H // Hc

    # Weights/biases stay resident in VMEM (constant index_map). If double
    # buffering them would eat a big share of the budget, single-buffer them.
    resident_bytes = (w1.size * w1.dtype.itemsize + w2.size * w2.dtype.itemsize
                      + b1.size * b1.dtype.itemsize + b2.size * b2.dtype.itemsize)
    single_buffer = (2 * resident_bytes) > int(0.35 * vmem_limit)

    def _resident_spec(shape):
        if single_buffer:
            return pl.BlockSpec(shape, lambda i: (0, 0),
                                pipeline_mode=pl.Buffered(1))
        return pl.BlockSpec(shape, lambda i: (0, 0))

    in_specs = [
        pl.BlockSpec((tm, C), lambda i: (i, 0)),   # x row tile (pipelined)
        _resident_spec((C, H)),                    # W1
        _resident_spec((1, H)),                    # b1
        _resident_spec((H, C)),                    # W2
        _resident_spec((1, C)),                    # b2
    ]

    if n_chunks == 1:
        kernel = _make_simple_kernel()
        scratch_shapes = ()
    else:
        kernel = _make_chunked_kernel(Hc, n_chunks)
        scratch_shapes = [pltpu.VMEM((tm, C), jnp.float32)]

    itemsize = x2.dtype.itemsize
    bytes_accessed = (M_pad * C * itemsize + resident_bytes
                      + M_pad * C * jnp.dtype(out_dtype).itemsize)
    cost = pl.CostEstimate(
        flops=4 * M_pad * C * H,
        transcendentals=M_pad * H,         # one exp per hidden activation (erf)
        bytes_accessed=bytes_accessed)

    out = pl.pallas_call(
        kernel,
        out_shape=jax.ShapeDtypeStruct((M_pad, C), out_dtype),
        grid=(M_pad // tm,),
        in_specs=in_specs,
        out_specs=pl.BlockSpec((tm, C), lambda i: (i, 0)),
        scratch_shapes=scratch_shapes,
        compiler_params=pltpu.CompilerParams(
            dimension_semantics=("parallel",),
            vmem_limit_bytes=vmem_limit),
        cost_estimate=cost,
    )(x2, w1, b1, w2, b2)

    if M_pad != M:
        out = out[:M]
    return out.reshape(orig_shape)


def mlp_reference(x, w1, b1, w2, b2):
    """Pure-JAX reference mirroring the PyTorch forward (exact GELU)."""
    h = x @ w1 + b1.reshape(-1)
    h = jax.nn.gelu(h, approximate=False)   # nn.GELU() default = exact erf GELU
    return h @ w2 + b2.reshape(-1)


if __name__ == "__main__":
    # Small shapes consistent with a ViT MLP block: tokens (B, N, C), hidden = 2*C.
    B, N, in_features, hidden_features = 2, 16, 128, 256

    key = jax.random.PRNGKey(0)
    kx, k1, kb1, k2, kb2, kodd = jax.random.split(key, 6)

    x = jax.random.normal(kx, (B, N, in_features), dtype=jnp.float32)
    # Parameters in (in, out) layout (equivalent to nn.Linear weight.T) + biases.
    w1 = 0.05 * jax.random.normal(k1, (in_features, hidden_features), dtype=jnp.float32)
    b1 = 0.01 * jax.random.normal(kb1, (1, hidden_features), dtype=jnp.float32)
    w2 = 0.05 * jax.random.normal(k2, (hidden_features, in_features), dtype=jnp.float32)
    b2 = 0.01 * jax.random.normal(kb2, (1, in_features), dtype=jnp.float32)

    # 1) Default path (single hidden chunk, f32).
    y = jax.block_until_ready(mlp_forward(x, w1, b1, w2, b2))
    y_ref = mlp_reference(x, w1, b1, w2, b2)
    assert y.shape == (B, N, in_features)
    assert jnp.allclose(y, y_ref, atol=2e-4, rtol=2e-4), "mismatch (default path)"

    # 2) Hidden-chunked path (2 chunks of 128) with the VMEM scratch accumulator.
    y_chunk = jax.block_until_ready(
        mlp_forward(x, w1, b1, w2, b2, hidden_chunk=128))
    assert jnp.allclose(y_chunk, y_ref, atol=2e-4, rtol=2e-4), "mismatch (chunked path)"

    # 3) Token count not a multiple of 8 -> exercises the M padding + slice-back.
    x_odd = jax.random.normal(kodd, (3, 13, in_features), dtype=jnp.float32)
    y_odd = jax.block_until_ready(mlp_forward(x_odd, w1, b1, w2, b2))
    y_odd_ref = mlp_reference(x_odd, w1, b1, w2, b2)
    assert jnp.allclose(y_odd, y_odd_ref, atol=2e-4, rtol=2e-4), "mismatch (padded M)"

    # 4) bf16 storage path (f32 accumulation / output); looser tolerance.
    y_bf16 = jax.block_until_ready(
        mlp_forward(x, w1, b1, w2, b2, compute_dtype=jnp.bfloat16))
    assert jnp.allclose(y_bf16, y_ref, atol=5e-2, rtol=5e-2), "mismatch (bf16 path)"

    print("KERNEL_OK")
</pallas_src>

<mosaic_0001>
module attributes {stable_mosaic.version = 11 : i64} {
  func.func @kernel(%arg0: i32, %arg1: memref<32x128xf32, #tpu.memory_space<vmem>>, %arg2: memref<128x256xf32, #tpu.memory_space<vmem>>, %arg3: memref<1x256xf32, #tpu.memory_space<vmem>>, %arg4: memref<256x128xf32, #tpu.memory_space<vmem>>, %arg5: memref<1x128xf32, #tpu.memory_space<vmem>>, %arg6: memref<32x128xf32, #tpu.memory_space<vmem>>) attributes {dimension_semantics = [#tpu.dimension_semantics<parallel>], iteration_bounds = array<i64: 1>, scalar_prefetch = 0 : i64, scratch_operands = 0 : i64, tpu.core_type = #tpu.core_type<tc>, window_params = [{transform_indices = @transform_0, window_bounds = array<i64: 32, 128>}, {pipeline_mode = #tpu.pipeline_mode<synchronous>, transform_indices = @transform_1, window_bounds = array<i64: 128, 256>}, {pipeline_mode = #tpu.pipeline_mode<synchronous>, transform_indices = @transform_2, window_bounds = array<i64: 1, 256>}, {pipeline_mode = #tpu.pipeline_mode<synchronous>, transform_indices = @transform_3, window_bounds = array<i64: 256, 128>}, {pipeline_mode = #tpu.pipeline_mode<synchronous>, transform_indices = @transform_4, window_bounds = array<i64: 1, 128>}, {transform_indices = @transform_5, window_bounds = array<i64: 32, 128>}]} {
    %c0 = arith.constant 0 : index
    %c0_0 = arith.constant 0 : index
    %0 = vector.load %arg1[%c0, %c0_0] : memref<32x128xf32, #tpu.memory_space<vmem>>, vector<32x128xf32>
    %c0_1 = arith.constant 0 : index
    %c0_2 = arith.constant 0 : index
    %1 = vector.load %arg2[%c0_1, %c0_2] : memref<128x256xf32, #tpu.memory_space<vmem>>, vector<128x256xf32>
    %cst = arith.constant dense<0.000000e+00> : vector<32x256xf32>
    %2 = tpu.matmul %0, %1, %cst {dimension_numbers = #tpu.dot_dimension_numbers<[1], [0], [0], [1], [0, 0, 1, 1], [], []>} : vector<32x128xf32>, vector<128x256xf32>, vector<32x256xf32> -> vector<32x256xf32>
    %c0_3 = arith.constant 0 : index
    %c0_4 = arith.constant 0 : index
    %3 = vector.load %arg3[%c0_3, %c0_4] : memref<1x256xf32, #tpu.memory_space<vmem>>, vector<1x256xf32>
    %4 = vector.broadcast %3 : vector<1x256xf32> to vector<32x256xf32>
    %5 = arith.addf %2, %4 : vector<32x256xf32>
    %cst_5 = arith.constant 5.000000e-01 : f32
    %6 = vector.broadcast %cst_5 : f32 to vector<32x256xf32>
    %7 = arith.mulf %6, %5 : vector<32x256xf32>
    %cst_6 = arith.constant 0.707106769 : f32
    %8 = vector.broadcast %cst_6 : f32 to vector<32x256xf32>
    %9 = arith.mulf %5, %8 : vector<32x256xf32>
    %cst_7 = arith.constant 0.000000e+00 : f32
    %10 = vector.broadcast %cst_7 : f32 to vector<32x256xf32>
    %11 = arith.cmpf oge, %9, %10 : vector<32x256xf32>
    %cst_8 = arith.constant 1.000000e+00 : f32
    %cst_9 = arith.constant -1.000000e+00 : f32
    %12 = vector.broadcast %cst_8 : f32 to vector<32x256xf32>
    %13 = vector.broadcast %cst_9 : f32 to vector<32x256xf32>
    %14 = arith.select %11, %12, %13 : vector<32x256xi1>, vector<32x256xf32>
    %15 = math.absf %9 : vector<32x256xf32>
    %cst_10 = arith.constant 0.327591091 : f32
    %16 = vector.broadcast %cst_10 : f32 to vector<32x256xf32>
    %17 = arith.mulf %16, %15 : vector<32x256xf32>
    %cst_11 = arith.constant 1.000000e+00 : f32
    %18 = vector.broadcast %cst_11 : f32 to vector<32x256xf32>
    %19 = arith.addf %18, %17 : vector<32x256xf32>
    %20 = tpu.reciprocal %19 : vector<32x256xf32> -> vector<32x256xf32>
    %cst_12 = arith.constant 1.06140542 : f32
    %21 = vector.broadcast %cst_12 : f32 to vector<32x256xf32>
    %22 = arith.mulf %21, %20 : vector<32x256xf32>
    %cst_13 = arith.constant -1.45315206 : f32
    %23 = vector.broadcast %cst_13 : f32 to vector<32x256xf32>
    %24 = arith.addf %22, %23 : vector<32x256xf32>
    %25 = arith.mulf %24, %20 : vector<32x256xf32>
    %cst_14 = arith.constant 1.42141378 : f32
    %26 = vector.broadcast %cst_14 : f32 to vector<32x256xf32>
    %27 = arith.addf %25, %26 : vector<32x256xf32>
    %28 = arith.mulf %27, %20 : vector<32x256xf32>
    %cst_15 = arith.constant -0.284496725 : f32
    %29 = vector.broadcast %cst_15 : f32 to vector<32x256xf32>
    %30 = arith.addf %28, %29 : vector<32x256xf32>
    %31 = arith.mulf %30, %20 : vector<32x256xf32>
    %cst_16 = arith.constant 0.254829586 : f32
    %32 = vector.broadcast %cst_16 : f32 to vector<32x256xf32>
    %33 = arith.addf %31, %32 : vector<32x256xf32>
    %34 = arith.mulf %33, %20 : vector<32x256xf32>
    %35 = arith.mulf %15, %15 : vector<32x256xf32>
    %cst_17 = arith.constant 0.000000e+00 : f32
    %36 = vector.broadcast %cst_17 : f32 to vector<32x256xf32>
    %37 = arith.subf %36, %35 : vector<32x256xf32>
    %38 = math.exp %37 : vector<32x256xf32>
    %39 = arith.mulf %34, %38 : vector<32x256xf32>
    %cst_18 = arith.constant 1.000000e+00 : f32
    %40 = vector.broadcast %cst_18 : f32 to vector<32x256xf32>
    %41 = arith.subf %40, %39 : vector<32x256xf32>
    %42 = arith.mulf %14, %41 : vector<32x256xf32>
    %cst_19 = arith.constant 1.000000e+00 : f32
    %43 = vector.broadcast %cst_19 : f32 to vector<32x256xf32>
    %44 = arith.addf %43, %42 : vector<32x256xf32>
    %45 = arith.mulf %7, %44 : vector<32x256xf32>
    %c0_20 = arith.constant 0 : index
    %c0_21 = arith.constant 0 : index
    %46 = vector.load %arg4[%c0_20, %c0_21] : memref<256x128xf32, #tpu.memory_space<vmem>>, vector<256x128xf32>
    %cst_22 = arith.constant dense<0.000000e+00> : vector<32x128xf32>
    %47 = tpu.matmul %45, %46, %cst_22 {dimension_numbers = #tpu.dot_dimension_numbers<[1], [0], [0], [1], [0, 0, 1, 1], [], []>} : vector<32x256xf32>, vector<256x128xf32>, vector<32x128xf32> -> vector<32x128xf32>
    %c0_23 = arith.constant 0 : index
    %c0_24 = arith.constant 0 : index
    %48 = vector.load %arg5[%c0_23, %c0_24] : memref<1x128xf32, #tpu.memory_space<vmem>>, vector<1x128xf32>
    %49 = vector.broadcast %48 : vector<1x128xf32> to vector<32x128xf32>
    %50 = arith.addf %47, %49 : vector<32x128xf32>
    %c0_25 = arith.constant 0 : index
    %c0_26 = arith.constant 0 : index
    %51 = vector.load %arg6[%c0_25, %c0_26] : memref<32x128xf32, #tpu.memory_space<vmem>>, vector<32x128xf32>
    tpu.vector_store %arg6[%c0_25, %c0_26], %50 {strides = array<i32>} : memref<32x128xf32, #tpu.memory_space<vmem>>, vector<32x128xf32>,
    return
  }
  func.func @transform_0(%arg0: i32) -> (i32, i32) {
    %c0_i32 = arith.constant 0 : i32
    %c0_i32_0 = arith.constant 0 : i32
    return %arg0, %c0_i32 : i32, i32
  }
  func.func @transform_1(%arg0: i32) -> (i32, i32) {
    %c0_i32 = arith.constant 0 : i32
    %c0_i32_0 = arith.constant 0 : i32
    %c0_i32_1 = arith.constant 0 : i32
    return %c0_i32, %c0_i32_0 : i32, i32
  }
  func.func @transform_2(%arg0: i32) -> (i32, i32) {
    %c0_i32 = arith.constant 0 : i32
    %c0_i32_0 = arith.constant 0 : i32
    %c0_i32_1 = arith.constant 0 : i32
    return %c0_i32, %c0_i32_0 : i32, i32
  }
  func.func @transform_3(%arg0: i32) -> (i32, i32) {
    %c0_i32 = arith.constant 0 : i32
    %c0_i32_0 = arith.constant 0 : i32
    %c0_i32_1 = arith.constant 0 : i32
    return %c0_i32, %c0_i32_0 : i32, i32
  }
  func.func @transform_4(%arg0: i32) -> (i32, i32) {
    %c0_i32 = arith.constant 0 : i32
    %c0_i32_0 = arith.constant 0 : i32
    %c0_i32_1 = arith.constant 0 : i32
    return %c0_i32, %c0_i32_0 : i32, i32
  }
  func.func @transform_5(%arg0: i32) -> (i32, i32) {
    %c0_i32 = arith.constant 0 : i32
    %c0_i32_0 = arith.constant 0 : i32
    return %arg0, %c0_i32 : i32, i32
  }
}

</mosaic_0001>

<llo_original>
// kernel: tpu_custom_call.1
$region0: #{tpu_custom_call.1}
  #allocation0 [shape = 'u32[]', space=smem, size = 0x4, offset = 0x4, fixed_abs, tag = 'smem constant byte address 0x4 - core index']
  #allocation1 [shape = 'u32[144,128]{1,0:T(1,128)}', space=vmem, size = 0x12000, scoped, tag = 'internal scratch']
  %s0 = inlined_call_operand.hbm [shape: f32[32,128], index: 0, kind: input, shape index: {}]
  %s1 = inlined_call_operand.hbm [shape: f32[128,256], index: 1, kind: input, shape index: {}]
  %s2 = inlined_call_operand.vmem [shape: f32[1,256], index: 2, kind: input, shape index: {}]
  %s3 = inlined_call_operand.hbm [shape: f32[256,128], index: 3, kind: input, shape index: {}]
  %s4 = inlined_call_operand.vmem [shape: f32[1,128], index: 4, kind: input, shape index: {}]
  %s5 = inlined_call_operand.hbm [shape: f32[32,128], index: 5, kind: output, shape index: {}]
  %s6 = sld [smem:[#allocation0]]
  $region42: #{tpu_custom_call.1} parent=0
    _
  %s8 = ssub.s32 1, %s6
  %s9 = scalar_select 0, %s8, %s6
  $region1: #{tpu_custom_call.1} parent=0
    #allocation2 [shape = 'u8[16384]{0}', space=vmem, size = 0x4000, scoped, tag = 'input window, operand 0, single buffered']
    #allocation3 [shape = 's32[1]{0}', space=sflag, size = 0x4, scoped, tag = 'scoped memory for tpu_custom_call.1']
    #allocation4 [shape = 's32[1]{0}', space=sflag, size = 0x4, scoped, tag = 'scoped memory for tpu_custom_call.1']
    #allocation5 [shape = 'u8[131072]{0}', space=vmem, size = 0x20000, scoped, tag = 'input window, operand 1, single buffered']
    #allocation6 [shape = 's32[1]{0}', space=sflag, size = 0x4, scoped, tag = 'scoped memory for tpu_custom_call.1']
    #allocation7 [shape = 'u8[131072]{0}', space=vmem, size = 0x20000, scoped, tag = 'input window, operand 3, single buffered']
    #allocation8 [shape = 'u8[16384]{0}', space=vmem, size = 0x4000, scoped, tag = 'output window, operand 0, single buffered']
    %10 = vsyncpa [#allocation3], 0
    %11 = vsyncpa [#allocation6], 0
    %12 = vsyncpa [#allocation4], 0
    // Predicated region
    $region2: #{tpu_custom_call.1} parent=1 // pred_check
      _
    $region3: #{tpu_custom_call.1} parent=1 // pred_check_branch
      %14 = sbr.rel (0) target = $region5
    $region4: #{tpu_custom_call.1} parent=1 // pred_region
      %s16 = ssub.s32 512, 512
      %17 = vsyncadd [#allocation3], %s16
      %s18 = sshll.u32 [#allocation2], 4
      %s19 = int_to_ptr.vmem [resolvable:$true] %s18
      %24 = dma.hbm_to_vmem [thread:$0]  %s0, 512, %s19, [#allocation3], 128, 128, 8
    $region5: #{tpu_custom_call.1} parent=1 // pred_fallthru
      _
    // Predicated region
    $region6: #{tpu_custom_call.1} parent=1 // pred_check
      _
    $region7: #{tpu_custom_call.1} parent=1 // pred_check_branch
      %26 = sbr.rel (0) target = $region9
    $region8: #{tpu_custom_call.1} parent=1 // pred_region
      %s28 = ssub.s32 4096, 4096
      %29 = vsyncadd [#allocation6], %s28
      %s30 = sshll.u32 [#allocation5], 4
      %s31 = int_to_ptr.vmem [resolvable:$true] %s30
      %36 = dma.hbm_to_vmem [thread:$0]  %s1, 4096, %s31, [#allocation6], 256, 256, 16
    $region9: #{tpu_custom_call.1} parent=1 // pred_fallthru
      _
    // Predicated region
    $region10: #{tpu_custom_call.1} parent=1 // pred_check
      _
    $region11: #{tpu_custom_call.1} parent=1 // pred_check_branch
      %38 = sbr.rel (0) target = $region13
    $region12: #{tpu_custom_call.1} parent=1 // pred_region
      _
    $region13: #{tpu_custom_call.1} parent=1 // pred_fallthru
      _
    // Predicated region
    $region14: #{tpu_custom_call.1} parent=1 // pred_check
      _
    $region15: #{tpu_custom_call.1} parent=1 // pred_check_branch
      %40 = sbr.rel (0) target = $region17
    $region16: #{tpu_custom_call.1} parent=1 // pred_region
      %s42 = ssub.s32 4096, 4096
      %43 = vsyncadd [#allocation6], %s42
      %s44 = sshll.u32 [#allocation7], 4
      %s45 = int_to_ptr.vmem [resolvable:$true] %s44
      %50 = dma.hbm_to_vmem [thread:$0]  %s3, 4096, %s45, [#allocation6], 128, 128, 8
    $region17: #{tpu_custom_call.1} parent=1 // pred_fallthru
      _
    // Predicated region
    $region18: #{tpu_custom_call.1} parent=1 // pred_check
      _
    $region19: #{tpu_custom_call.1} parent=1 // pred_check_branch
      %52 = sbr.rel (0) target = $region21
    $region20: #{tpu_custom_call.1} parent=1 // pred_region
      _
    $region21: #{tpu_custom_call.1} parent=1 // pred_fallthru
      _
    // Predicated region
    $region22: #{tpu_custom_call.1} parent=1 // pred_check
      _
    $region23: #{tpu_custom_call.1} parent=1 // pred_check_branch
      %54 = sbr.rel (0) target = $region25
    $region24: #{tpu_custom_call.1} parent=1 // pred_region
      %55 = dma.done [#allocation3], 512
    $region25: #{tpu_custom_call.1} parent=1 // pred_fallthru
      _
    // Predicated region
    $region26: #{tpu_custom_call.1} parent=1 // pred_check
      _
    $region27: #{tpu_custom_call.1} parent=1 // pred_check_branch
      %57 = sbr.rel (0) target = $region29
    $region28: #{tpu_custom_call.1} parent=1 // pred_region
      %58 = dma.done [#allocation6], 4096
    $region29: #{tpu_custom_call.1} parent=1 // pred_fallthru
      _
    // Predicated region
    $region30: #{tpu_custom_call.1} parent=1 // pred_check
      _
    $region31: #{tpu_custom_call.1} parent=1 // pred_check_branch
      %60 = sbr.rel (0) target = $region33
    $region32: #{tpu_custom_call.1} parent=1 // pred_region
      %61 = dma.done [#allocation6], 4096
    $region33: #{tpu_custom_call.1} parent=1 // pred_fallthru
      _
    %v62 = vld [vmem:[#allocation2] sm:$0xff]
    %v63 = vld [vmem:[#allocation2 + $0x8] sm:$0xff]
    %v64 = vld [vmem:[#allocation2 + $0x10] sm:$0xff]
    %v65 = vld [vmem:[#allocation2 + $0x18] sm:$0xff]
    %v66 = vld [vmem:[#allocation5] sm:$0xff]
    %v67 = vld [vmem:[#allocation5 + $0x8] sm:$0xff]
    %v68 = vld [vmem:[#allocation5 + $0x10] sm:$0xff]
    %v69 = vld [vmem:[#allocation5 + $0x18] sm:$0xff]
    %v70 = vld [vmem:[#allocation5 + $0x20] sm:$0xff]
    %v71 = vld [vmem:[#allocation5 + $0x28] sm:$0xff]
    %v72 = vld [vmem:[#allocation5 + $0x30] sm:$0xff]
    %v73 = vld [vmem:[#allocation5 + $0x38] sm:$0xff]
    %v74 = vld [vmem:[#allocation5 + $0x40] sm:$0xff]
    %v75 = vld [vmem:[#allocation5 + $0x48] sm:$0xff]
    %v76 = vld [vmem:[#allocation5 + $0x50] sm:$0xff]
    %v77 = vld [vmem:[#allocation5 + $0x58] sm:$0xff]
    %v78 = vld [vmem:[#allocation5 + $0x60] sm:$0xff]
    %v79 = vld [vmem:[#allocation5 + $0x68] sm:$0xff]
    %v80 = vld [vmem:[#allocation5 + $0x70] sm:$0xff]
    %v81 = vld [vmem:[#allocation5 + $0x78] sm:$0xff]
    %v82 = vld [vmem:[#allocation5 + $0x80] sm:$0xff]
    %v83 = vld [vmem:[#allocation5 + $0x88] sm:$0xff]
    %v84 = vld [vmem:[#allocation5 + $0x90] sm:$0xff]
    %v85 = vld [vmem:[#allocation5 + $0x98] sm:$0xff]
    %v86 = vld [vmem:[#allocation5 + $0xa0] sm:$0xff]
    %v87 = vld [vmem:[#allocation5 + $0xa8] sm:$0xff]
    %v88 = vld [vmem:[#allocation5 + $0xb0] sm:$0xff]
    %v89 = vld [vmem:[#allocation5 + $0xb8] sm:$0xff]
    %v90 = vld [vmem:[#allocation5 + $0xc0] sm:$0xff]
    %v91 = vld [vmem:[#allocation5 + $0xc8] sm:$0xff]
    %v92 = vld [vmem:[#allocation5 + $0xd0] sm:$0xff]
    %v93 = vld [vmem:[#allocation5 + $0xd8] sm:$0xff]
    %v94 = vld [vmem:[#allocation5 + $0xe0] sm:$0xff]
    %v95 = vld [vmem:[#allocation5 + $0xe8] sm:$0xff]
    %v96 = vld [vmem:[#allocation5 + $0xf0] sm:$0xff]
    %v97 = vld [vmem:[#allocation5 + $0xf8] sm:$0xff]
    %v98 = vld [vmem:[%s2] sm:$0x3]
    %v100 = vlaneseq
    %v101 = vshrl.u32 %v100, 7
    %v102 = vsub.s32 0, %v101
    %v103 = vrot.slane %v98, %v102
    %v104 = vlaneseq
    %v105 = vshrl.u32 %v104, 7
    %v106 = vsub.s32 1, %v105
    %v107 = vrot.slane %v98, %v106
    %110 = vmatprep.subr.mxu0 %v97
    %111 = vmatpush1.msra.mxu0 %v96
    %112 = vmatprep.subr.mxu0 %v95
    %113 = vmatpush1.msra.mxu0 %v94
    %114 = vmatprep.subr.mxu0 %v93
    %115 = vmatpush1.msra.mxu0 %v92
    %116 = vmatprep.subr.mxu0 %v91
    %117 = vmatpush1.msra.mxu0 %v90
    %118 = vmatprep.subr.mxu0 %v89
    %119 = vmatpush1.msra.mxu0 %v88
    %120 = vmatprep.subr.mxu0 %v87
    %121 = vmatpush1.msra.mxu0 %v86
    %122 = vmatprep.subr.mxu0 %v85
    %123 = vmatpush1.msra.mxu0 %v84
    %124 = vmatprep.subr.mxu0 %v83
    %125 = vmatpush1.msra.mxu0 %v82
    %126 = vmatprep.subr.mxu0 %v81
    %127 = vmatpush1.msra.mxu0 %v80
    %128 = vmatprep.subr.mxu0 %v79
    %129 = vmatpush1.msra.mxu0 %v78
    %130 = vmatprep.subr.mxu0 %v77
    %131 = vmatpush1.msra.mxu0 %v76
    %132 = vmatprep.subr.mxu0 %v75
    %133 = vmatpush1.msra.mxu0 %v74
    %134 = vmatprep.subr.mxu0 %v73
    %135 = vmatpush1.msra.mxu0 %v72
    %136 = vmatprep.subr.mxu0 %v71
    %137 = vmatpush1.msra.mxu0 %v70
    %138 = vmatprep.subr.mxu0 %v69
    %139 = vmatpush1.msra.mxu0 %v68
    %140 = vmatprep.subr.mxu0 %v67
    %141 = vmatpush1.msra.mxu0 %v66
    %142 = vmatprep.subr.mxu0 0.0
    %143 = vmatpush2.msra.mxu0 0.0
    %144 = vmatprep.subr.mxu0 0.0
    %145 = vmatpush2.msra.mxu0 0.0
    %146 = vmatprep.subr.mxu0 0.0
    %147 = vmatpush2.msra.mxu0 0.0
    %148 = vmatprep.subr.mxu0 0.0
    %149 = vmatpush2.msra.mxu0 0.0
    %150 = vmatprep.subr.mxu0 0.0
    %151 = vmatpush2.msra.mxu0 0.0
    %152 = vmatprep.subr.mxu0 0.0
    %153 = vmatpush2.msra.mxu0 0.0
    %154 = vmatprep.subr.mxu0 0.0
    %155 = vmatpush2.msra.mxu0 0.0
    %156 = vmatprep.subr.mxu0 0.0
    %157 = vmatpush2.msra.mxu0 0.0
    %158 = vmatprep.subr.mxu0 0.0
    %159 = vmatpush2.msra.mxu0 0.0
    %160 = vmatprep.subr.mxu0 0.0
    %161 = vmatpush2.msra.mxu0 0.0
    %162 = vmatprep.subr.mxu0 0.0
    %163 = vmatpush2.msra.mxu0 0.0
    %164 = vmatprep.subr.mxu0 0.0
    %165 = vmatpush2.msra.mxu0 0.0
    %166 = vmatprep.subr.mxu0 0.0
    %167 = vmatpush2.msra.mxu0 0.0
    %168 = vmatprep.subr.mxu0 0.0
    %169 = vmatpush2.msra.mxu0 0.0
    %170 = vmatprep.subr.mxu0 0.0
    %171 = vmatpush2.msra.mxu0 0.0
    %172 = vmatprep.subr.mxu0 0.0
    %173 = vmatpush2.msra.mxu0 0.0
    %174 = vmatprep.mubr.f32.mxu0 0.0
    %175 = vmatmul.mubr.f32.gmra.mxu0 %v62
    %v176 = vpop.f32.mrf.mxu0
    %v177 = vadd.f32 %v103, %v176
    %v178 = vpop.f32.mrf.mxu0
    %v179 = vadd.f32 %v107, %v178
    %180 = vmatprep.mubr.f32.mxu0 0.0
    %181 = vmatmul.mubr.f32.gmra.mxu0 %v63
    %v182 = vpop.f32.mrf.mxu0
    %v183 = vadd.f32 %v103, %v182
    %v184 = vpop.f32.mrf.mxu0
    %v185 = vadd.f32 %v107, %v184
    %186 = vmatprep.mubr.f32.mxu0 0.0
    %187 = vmatmul.mubr.f32.gmra.mxu0 %v64
    %v188 = vpop.f32.mrf.mxu0
    %v189 = vadd.f32 %v103, %v188
    %v190 = vpop.f32.mrf.mxu0
    %v191 = vadd.f32 %v107, %v190
    %192 = vmatprep.mubr.f32.mxu0 0.0
    %193 = vmatmul.mubr.f32.gmra.mxu0 %v65
    %v194 = vpop.f32.mrf.mxu0
    %v195 = vadd.f32 %v103, %v194
    %v196 = vpop.f32.mrf.mxu0
    %v197 = vadd.f32 %v107, %v196
    %198 = vdwg.mxu0
    %v199 = vmul.f32 %v177, 0.5
    %v200 = vmul.f32 %v179, 0.5
    %v201 = vmul.f32 %v183, 0.5
    %v202 = vmul.f32 %v185, 0.5
    %v203 = vmul.f32 %v189, 0.5
    %v204 = vmul.f32 %v191, 0.5
    %v205 = vmul.f32 %v195, 0.5
    %v206 = vmul.f32 %v197, 0.5
    %v207 = vmul.f32 %v177, 0.70710677
    %v208 = vmul.f32 %v179, 0.70710677
    %v209 = vmul.f32 %v183, 0.70710677
    %v210 = vmul.f32 %v185, 0.70710677
    %v211 = vmul.f32 %v189, 0.70710677
    %v212 = vmul.f32 %v191, 0.70710677
    %v213 = vmul.f32 %v195, 0.70710677
    %v214 = vmul.f32 %v197, 0.70710677
    %vm215 = vcmp.ge.f32.partialorder %v207, 0.0
    %vm216 = vcmp.ge.f32.partialorder %v208, 0.0
    %vm217 = vcmp.ge.f32.partialorder %v209, 0.0
    %vm218 = vcmp.ge.f32.partialorder %v210, 0.0
    %vm219 = vcmp.ge.f32.partialorder %v211, 0.0
    %vm220 = vcmp.ge.f32.partialorder %v212, 0.0
    %vm221 = vcmp.ge.f32.partialorder %v213, 0.0
    %vm222 = vcmp.ge.f32.partialorder %v214, 0.0
    %v223 = vsel %vm215, 1.0, -1.0
    %v224 = vsel %vm216, 1.0, -1.0
    %v225 = vsel %vm217, 1.0, -1.0
    %v226 = vsel %vm218, 1.0, -1.0
    %v227 = vsel %vm219, 1.0, -1.0
    %v228 = vsel %vm220, 1.0, -1.0
    %v229 = vsel %vm221, 1.0, -1.0
    %v230 = vsel %vm222, 1.0, -1.0
    %v231 = vand.u32 2147483647, %v207
    %v232 = vand.u32 2147483647, %v208
    %v233 = vand.u32 2147483647, %v209
    %v234 = vand.u32 2147483647, %v210
    %v235 = vand.u32 2147483647, %v211
    %v236 = vand.u32 2147483647, %v212
    %v237 = vand.u32 2147483647, %v213
    %v238 = vand.u32 2147483647, %v214
    %v239 = vmul.f32 %v231, 0.3275911
    %v240 = vmul.f32 %v232, 0.3275911
    %v241 = vmul.f32 %v233, 0.3275911
    %v242 = vmul.f32 %v234, 0.3275911
    %v243 = vmul.f32 %v235, 0.3275911
    %v244 = vmul.f32 %v236, 0.3275911
    %v245 = vmul.f32 %v237, 0.3275911
    %v246 = vmul.f32 %v238, 0.3275911
    %v247 = vadd.f32 %v239, 1.0
    %v248 = vadd.f32 %v240, 1.0
    %v249 = vadd.f32 %v241, 1.0
    %v250 = vadd.f32 %v242, 1.0
    %v251 = vadd.f32 %v243, 1.0
    %v252 = vadd.f32 %v244, 1.0
    %v253 = vadd.f32 %v245, 1.0
    %v254 = vadd.f32 %v246, 1.0
    %v255 = vrcp.pop %v247
    %v256 = vrcp.pop %v248
    %v257 = vrcp.pop %v249
    %v258 = vrcp.pop %v250
    %v259 = vrcp.pop %v251
    %v260 = vrcp.pop %v252
    %v261 = vrcp.pop %v253
    %v262 = vrcp.pop %v254
    %v263 = vmul.f32 %v255, 1.0614054
    %v264 = vmul.f32 %v256, 1.0614054
    %v265 = vmul.f32 %v257, 1.0614054
    %v266 = vmul.f32 %v258, 1.0614054
    %v267 = vmul.f32 %v259, 1.0614054
    %v268 = vmul.f32 %v260, 1.0614054
    %v269 = vmul.f32 %v261, 1.0614054
    %v270 = vmul.f32 %v262, 1.0614054
    %v271 = vadd.f32 %v263, -1.4531521
    %v272 = vadd.f32 %v264, -1.4531521
    %v273 = vadd.f32 %v265, -1.4531521
    %v274 = vadd.f32 %v266, -1.4531521
    %v275 = vadd.f32 %v267, -1.4531521
    %v276 = vadd.f32 %v268, -1.4531521
    %v277 = vadd.f32 %v269, -1.4531521
    %v278 = vadd.f32 %v270, -1.4531521
    %v279 = vmul.f32 %v271, %v255
    %v280 = vmul.f32 %v272, %v256
    %v281 = vmul.f32 %v273, %v257
    %v282 = vmul.f32 %v274, %v258
    %v283 = vmul.f32 %v275, %v259
    %v284 = vmul.f32 %v276, %v260
    %v285 = vmul.f32 %v277, %v261
    %v286 = vmul.f32 %v278, %v262
    %v287 = vadd.f32 %v279, 1.4214138
    %v288 = vadd.f32 %v280, 1.4214138
    %v289 = vadd.f32 %v281, 1.4214138
    %v290 = vadd.f32 %v282, 1.4214138
    %v291 = vadd.f32 %v283, 1.4214138
    %v292 = vadd.f32 %v284, 1.4214138
    %v293 = vadd.f32 %v285, 1.4214138
    %v294 = vadd.f32 %v286, 1.4214138
    %v295 = vmul.f32 %v287, %v255
    %v296 = vmul.f32 %v288, %v256
    %v297 = vmul.f32 %v289, %v257
    %v298 = vmul.f32 %v290, %v258
    %v299 = vmul.f32 %v291, %v259
    %v300 = vmul.f32 %v292, %v260
    %v301 = vmul.f32 %v293, %v261
    %v302 = vmul.f32 %v294, %v262
    %v303 = vadd.f32 %v295, -0.28449672
    %v304 = vadd.f32 %v296, -0.28449672
    %v305 = vadd.f32 %v297, -0.28449672
    %v306 = vadd.f32 %v298, -0.28449672
    %v307 = vadd.f32 %v299, -0.28449672
    %v308 = vadd.f32 %v300, -0.28449672
    %v309 = vadd.f32 %v301, -0.28449672
    %v310 = vadd.f32 %v302, -0.28449672
    %v311 = vmul.f32 %v303, %v255
    %v312 = vmul.f32 %v304, %v256
    %v313 = vmul.f32 %v305, %v257
    %v314 = vmul.f32 %v306, %v258
    %v315 = vmul.f32 %v307, %v259
    %v316 = vmul.f32 %v308, %v260
    %v317 = vmul.f32 %v309, %v261
    %v318 = vmul.f32 %v310, %v262
    %v319 = vadd.f32 %v311, 0.2548296
    %v320 = vadd.f32 %v312, 0.2548296
    %v321 = vadd.f32 %v313, 0.2548296
    %v322 = vadd.f32 %v314, 0.2548296
    %v323 = vadd.f32 %v315, 0.2548296
    %v324 = vadd.f32 %v316, 0.2548296
    %v325 = vadd.f32 %v317, 0.2548296
    %v326 = vadd.f32 %v318, 0.2548296
    %v327 = vmul.f32 %v319, %v255
    %v328 = vmul.f32 %v320, %v256
    %v329 = vmul.f32 %v321, %v257
    %v330 = vmul.f32 %v322, %v258
    %v331 = vmul.f32 %v323, %v259
    %v332 = vmul.f32 %v324, %v260
    %v333 = vmul.f32 %v325, %v261
    %v334 = vmul.f32 %v326, %v262
    %v335 = vmul.f32 %v231, %v231
    %v336 = vmul.f32 %v232, %v232
    %v337 = vmul.f32 %v233, %v233
    %v338 = vmul.f32 %v234, %v234
    %v339 = vmul.f32 %v235, %v235
    %v340 = vmul.f32 %v236, %v236
    %v341 = vmul.f32 %v237, %v237
    %v342 = vmul.f32 %v238, %v238
    %v343 = vsub.f32 0.0, %v335
    %v344 = vsub.f32 0.0, %v336
    %v345 = vsub.f32 0.0, %v337
    %v346 = vsub.f32 0.0, %v338
    %v347 = vsub.f32 0.0, %v339
    %v348 = vsub.f32 0.0, %v340
    %v349 = vsub.f32 0.0, %v341
    %v350 = vsub.f32 0.0, %v342
    %v351 = vmul.f32 %v343, 1.442695
    %v352 = vpow.pop %v351
    %v353 = vmul.f32 %v344, 1.442695
    %v354 = vpow.pop %v353
    %v355 = vmul.f32 %v345, 1.442695
    %v356 = vpow.pop %v355
    %v357 = vmul.f32 %v346, 1.442695
    %v358 = vpow.pop %v357
    %v359 = vmul.f32 %v347, 1.442695
    %v360 = vpow.pop %v359
    %v361 = vmul.f32 %v348, 1.442695
    %v362 = vpow.pop %v361
    %v363 = vmul.f32 %v349, 1.442695
    %v364 = vpow.pop %v363
    %v365 = vmul.f32 %v350, 1.442695
    %v366 = vpow.pop %v365
    %v367 = vmul.f32 %v327, %v352
    %v368 = vmul.f32 %v328, %v354
    %v369 = vmul.f32 %v329, %v356
    %v370 = vmul.f32 %v330, %v358
    %v371 = vmul.f32 %v331, %v360
    %v372 = vmul.f32 %v332, %v362
    %v373 = vmul.f32 %v333, %v364
    %v374 = vmul.f32 %v334, %v366
    %v375 = vsub.f32 1.0, %v367
    %v376 = vsub.f32 1.0, %v368
    %v377 = vsub.f32 1.0, %v369
    %v378 = vsub.f32 1.0, %v370
    %v379 = vsub.f32 1.0, %v371
    %v380 = vsub.f32 1.0, %v372
    %v381 = vsub.f32 1.0, %v373
    %v382 = vsub.f32 1.0, %v374
    %v383 = vmul.f32 %v223, %v375
    %v384 = vmul.f32 %v224, %v376
    %v385 = vmul.f32 %v225, %v377
    %v386 = vmul.f32 %v226, %v378
    %v387 = vmul.f32 %v227, %v379
    %v388 = vmul.f32 %v228, %v380
    %v389 = vmul.f32 %v229, %v381
    %v390 = vmul.f32 %v230, %v382
    %v391 = vadd.f32 %v383, 1.0
    %v392 = vadd.f32 %v384, 1.0
    %v393 = vadd.f32 %v385, 1.0
    %v394 = vadd.f32 %v386, 1.0
    %v395 = vadd.f32 %v387, 1.0
    %v396 = vadd.f32 %v388, 1.0
    %v397 = vadd.f32 %v389, 1.0
    %v398 = vadd.f32 %v390, 1.0
    %v399 = vmul.f32 %v199, %v391
    %v400 = vmul.f32 %v200, %v392
    %v401 = vmul.f32 %v201, %v393
    %v402 = vmul.f32 %v202, %v394
    %v403 = vmul.f32 %v203, %v395
    %v404 = vmul.f32 %v204, %v396
    %v405 = vmul.f32 %v205, %v397
    %v406 = vmul.f32 %v206, %v398
    %v407 = vld [vmem:[#allocation7] sm:$0xff]
    %v408 = vld [vmem:[#allocation7 + $0x8] sm:$0xff]
    %v409 = vld [vmem:[#allocation7 + $0x10] sm:$0xff]
    %v410 = vld [vmem:[#allocation7 + $0x18] sm:$0xff]
    %v411 = vld [vmem:[#allocation7 + $0x20] sm:$0xff]
    %v412 = vld [vmem:[#allocation7 + $0x28] sm:$0xff]
    %v413 = vld [vmem:[#allocation7 + $0x30] sm:$0xff]
    %v414 = vld [vmem:[#allocation7 + $0x38] sm:$0xff]
    %v415 = vld [vmem:[#allocation7 + $0x40] sm:$0xff]
    %v416 = vld [vmem:[#allocation7 + $0x48] sm:$0xff]
    %v417 = vld [vmem:[#allocation7 + $0x50] sm:$0xff]
    %v418 = vld [vmem:[#allocation7 + $0x58] sm:$0xff]
    %v419 = vld [vmem:[#allocation7 + $0x60] sm:$0xff]
    %v420 = vld [vmem:[#allocation7 + $0x68] sm:$0xff]
    %v421 = vld [vmem:[#allocation7 + $0x70] sm:$0xff]
    %v422 = vld [vmem:[#allocation7 + $0x78] sm:$0xff]
    %v423 = vld [vmem:[#allocation7 + $0x80] sm:$0xff]
    %v424 = vld [vmem:[#allocation7 + $0x88] sm:$0xff]
    %v425 = vld [vmem:[#allocation7 + $0x90] sm:$0xff]
    %v426 = vld [vmem:[#allocation7 + $0x98] sm:$0xff]
    %v427 = vld [vmem:[#allocation7 + $0xa0] sm:$0xff]
    %v428 = vld [vmem:[#allocation7 + $0xa8] sm:$0xff]
    %v429 = vld [vmem:[#allocation7 + $0xb0] sm:$0xff]
    %v430 = vld [vmem:[#allocation7 + $0xb8] sm:$0xff]
    %v431 = vld [vmem:[#allocation7 + $0xc0] sm:$0xff]
    %v432 = vld [vmem:[#allocation7 + $0xc8] sm:$0xff]
    %v433 = vld [vmem:[#allocation7 + $0xd0] sm:$0xff]
    %v434 = vld [vmem:[#allocation7 + $0xd8] sm:$0xff]
    %v435 = vld [vmem:[#allocation7 + $0xe0] sm:$0xff]
    %v436 = vld [vmem:[#allocation7 + $0xe8] sm:$0xff]
    %v437 = vld [vmem:[#allocation7 + $0xf0] sm:$0xff]
    %v438 = vld [vmem:[#allocation7 + $0xf8] sm:$0xff]
    %v439 = vld [vmem:[%s4] sm:$0x1]
    %v441 = vlaneseq
    %v442 = vshrl.u32 %v441, 7
    %v443 = vsub.s32 0, %v442
    %v444 = vrot.slane %v439, %v443
    %446 = vmatprep.subr.mxu0 0.0
    %447 = vmatpush1.msra.mxu0 %v422
    %448 = vmatprep.subr.mxu0 0.0
    %449 = vmatpush1.msra.mxu0 %v421
    %450 = vmatprep.subr.mxu0 0.0
    %451 = vmatpush1.msra.mxu0 %v420
    %452 = vmatprep.subr.mxu0 0.0
    %453 = vmatpush1.msra.mxu0 %v419
    %454 = vmatprep.subr.mxu0 0.0
    %455 = vmatpush1.msra.mxu0 %v418
    %456 = vmatprep.subr.mxu0 0.0
    %457 = vmatpush1.msra.mxu0 %v417
    %458 = vmatprep.subr.mxu0 0.0
    %459 = vmatpush1.msra.mxu0 %v416
    %460 = vmatprep.subr.mxu0 0.0
    %461 = vmatpush1.msra.mxu0 %v415
    %462 = vmatprep.subr.mxu0 0.0
    %463 = vmatpush1.msra.mxu0 %v414
    %464 = vmatprep.subr.mxu0 0.0
    %465 = vmatpush1.msra.mxu0 %v413
    %466 = vmatprep.subr.mxu0 0.0
    %467 = vmatpush1.msra.mxu0 %v412
    %468 = vmatprep.subr.mxu0 0.0
    %469 = vmatpush1.msra.mxu0 %v411
    %470 = vmatprep.subr.mxu0 0.0
    %471 = vmatpush1.msra.mxu0 %v410
    %472 = vmatprep.subr.mxu0 0.0
    %473 = vmatpush1.msra.mxu0 %v409
    %474 = vmatprep.subr.mxu0 0.0
    %475 = vmatpush1.msra.mxu0 %v408
    %476 = vmatprep.subr.mxu0 0.0
    %477 = vmatpush1.msra.mxu0 %v407
    %478 = vmatprep.subr.mxu0 0.0
    %479 = vmatpush2.msra.mxu0 %v438
    %480 = vmatprep.subr.mxu0 0.0
    %481 = vmatpush2.msra.mxu0 %v437
    %482 = vmatprep.subr.mxu0 0.0
    %483 = vmatpush2.msra.mxu0 %v436
    %484 = vmatprep.subr.mxu0 0.0
    %485 = vmatpush2.msra.mxu0 %v435
    %486 = vmatprep.subr.mxu0 0.0
    %487 = vmatpush2.msra.mxu0 %v434
    %488 = vmatprep.subr.mxu0 0.0
    %489 = vmatpush2.msra.mxu0 %v433
    %490 = vmatprep.subr.mxu0 0.0
    %491 = vmatpush2.msra.mxu0 %v432
    %492 = vmatprep.subr.mxu0 0.0
    %493 = vmatpush2.msra.mxu0 %v431
    %494 = vmatprep.subr.mxu0 0.0
    %495 = vmatpush2.msra.mxu0 %v430
    %496 = vmatprep.subr.mxu0 0.0
    %497 = vmatpush2.msra.mxu0 %v429
    %498 = vmatprep.subr.mxu0 0.0
    %499 = vmatpush2.msra.mxu0 %v428
    %500 = vmatprep.subr.mxu0 0.0
    %501 = vmatpush2.msra.mxu0 %v427
    %502 = vmatprep.subr.mxu0 0.0
    %503 = vmatpush2.msra.mxu0 %v426
    %504 = vmatprep.subr.mxu0 0.0
    %505 = vmatpush2.msra.mxu0 %v425
    %506 = vmatprep.subr.mxu0 0.0
    %507 = vmatpush2.msra.mxu0 %v424
    %508 = vmatprep.subr.mxu0 0.0
    %509 = vmatpush2.msra.mxu0 %v423
    %510 = vmatprep.mubr.f32.mxu0 %v400
    %511 = vmatmul.mubr.f32.gmra.mxu0 %v399
    %v512 = vpop.f32.mrf.mxu0
    %v513 = vadd.f32 %v444, %v512
    %v514 = vpop.f32.mrf.mxu0
    %515 = vmatprep.mubr.f32.mxu0 %v402
    %516 = vmatmul.mubr.f32.gmra.mxu0 %v401
    %v517 = vpop.f32.mrf.mxu0
    %v518 = vadd.f32 %v444, %v517
    %v519 = vpop.f32.mrf.mxu0
    %520 = vmatprep.mubr.f32.mxu0 %v404
    %521 = vmatmul.mubr.f32.gmra.mxu0 %v403
    %v522 = vpop.f32.mrf.mxu0
    %v523 = vadd.f32 %v444, %v522
    %v524 = vpop.f32.mrf.mxu0
    %525 = vmatprep.mubr.f32.mxu0 %v406
    %526 = vmatmul.mubr.f32.gmra.mxu0 %v405
    %v527 = vpop.f32.mrf.mxu0
    %v528 = vadd.f32 %v444, %v527
    %v529 = vpop.f32.mrf.mxu0
    %530 = vdwg.mxu0
    %531 = vst [vmem:[#allocation8] sm:$0xff] %v513
    %532 = vst [vmem:[#allocation8 + $0x8] sm:$0xff] %v518
    %533 = vst [vmem:[#allocation8 + $0x10] sm:$0xff] %v523
    %534 = vst [vmem:[#allocation8 + $0x18] sm:$0xff] %v528
    // Predicated region
    $region34: #{tpu_custom_call.1} parent=1 // pred_check
      _
    $region35: #{tpu_custom_call.1} parent=1 // pred_check_branch
      %536 = sbr.rel (0) target = $region37
    $region36: #{tpu_custom_call.1} parent=1 // pred_region
      %s538 = ssub.s32 512, 512
      %539 = vsyncadd [#allocation4], %s538
      %s540 = sshll.u32 [#allocation8], 4
      %s541 = int_to_ptr.vmem [resolvable:$true] %s540
      %546 = dma.vmem_to_hbm [thread:$0]  %s541, 512, %s5, [#allocation4], 128, 128, 8
    $region37: #{tpu_custom_call.1} parent=1 // pred_fallthru
      _
    // Predicated region
    $region38: #{tpu_custom_call.1} parent=1 // pred_check
      _
    $region39: #{tpu_custom_call.1} parent=1 // pred_check_branch
      %548 = sbr.rel (0) target = $region41
    $region40: #{tpu_custom_call.1} parent=1 // pred_region
      %549 = dma.done [#allocation4], 512
    $region41: #{tpu_custom_call.1} parent=1 // pred_fallthru
      _
    %550 = vsyncpa [#allocation3], 1
    %551 = vsyncpa [#allocation6], 1
    %552 = vsyncpa [#allocation4], 1

</llo_original>
